<compile_context>
chip_gen: v6e
topology: v6e:2x2x1
jax: 0.10.0
libtpu: 0.0.40
codegen_flags: <defaults>
</compile_context>

<pallas_src>
import math

import jax
import jax.numpy as jnp
from jax.experimental import pallas as pl
from jax.experimental.pallas import tpu as pltpu

# ---------------- configuration (small, deterministic) ----------------
B = 16                       # batch size (must be a multiple of TILE_B)
TILE_B = 8                   # batch tile = sublane count (replicated biases rely on this)
DIM_Z = 32                   # latent dim
HID = 64                     # dims_shared_dec[0]
DIMS_H = {"rna": [48], "atac": [32]}
DIMS_X = {"rna": [48], "atac": [20, 20]}
CHUNK = 16                   # dims_after_dec_atac[0]
DIM_H_RNA = DIMS_H["rna"][0]             # 48
DIM_H_ATAC = DIMS_H["atac"][0]           # 32
TOTAL_HIDDEN = DIM_H_RNA + DIM_H_ATAC    # 80
ATAC_OUT = sum(DIMS_X["atac"])           # 40
OUT_TOTAL = DIMS_X["rna"][0] + ATAC_OUT  # 88  (rna lanes 0..47, atac lanes 48..87)
LANE = 128
LN_EPS = 1e-5

assert B % TILE_B == 0
assert TILE_B == 8           # replicated-bias rows are stored 8-deep

# ----- packed-parameter slab row layout (all blocks 8-row aligned) -----
R_W1 = 0                      # (LANE, HID)   rows   0..127 (rows >= DIM_Z zero)
R_W2 = R_W1 + LANE            # (HID, LANE)   rows 128..191 (lanes >= 80 zero)
R_WP = R_W2 + HID             # (2*CHUNK,LANE)rows 192..223 block-diag in lanes 48..87
R_B1 = R_WP + 2 * CHUNK       # (8, HID)      rows 224..231 replicated bias
R_G1 = R_B1 + 8               # (8, HID)      rows 232..239
R_BT1 = R_G1 + 8              # (8, HID)      rows 240..247
R_B2 = R_BT1 + 8              # (8, LANE)     rows 248..255 (lanes 0..79 valid)
R_GBC = R_B2 + 8              # (8, DIM_H_ATAC) rows 256..263
R_BTBC = R_GBC + 8            # (8, DIM_H_ATAC) rows 264..271
R_BP = R_BTBC + 8             # (8, LANE)     rows 272..279 (lanes 48..87 valid)
PACK_ROWS = R_BP + 8          # 280 rows  -> 280*128*4B = 140 KiB (resident, trivial VMEM)

# ---------------- math helpers ----------------------------------------


def _layer_norm(x, gamma, beta, eps=LN_EPS):
    mu = jnp.mean(x, axis=-1, keepdims=True)
    var = jnp.mean((x - mu) ** 2, axis=-1, keepdims=True)
    return (x - mu) * jax.lax.rsqrt(var + eps) * gamma + beta


def _mish_fast(x):
    # mish(x) = x * tanh(softplus(x)) = x * (1 - 2 / ((1 + e^x)^2 + 1))
    # Single transcendental; overflow-safe: e^x=inf -> 2/inf=0 -> mish=x.
    t = jnp.exp(x)
    u = 1.0 + t
    return x * (1.0 - 2.0 / (u * u + 1.0))


def _mish_ref(x):
    return x * jnp.tanh(jax.nn.softplus(x))


# ---------------- Pallas kernel (whole forward pass fused) ------------


def decoder_kernel(z_ref, p_ref, out_ref):
    z = z_ref[...]                                            # (TILE_B, 128), lanes>=DIM_Z are 0

    # static, sublane-aligned slices out of the resident parameter slab
    w1 = p_ref[R_W1:R_W1 + LANE, :HID]                        # (128, 64) (zero-padded rows)
    b1 = p_ref[R_B1:R_B1 + TILE_B, :HID]                      # (8, 64) replicated
    g1 = p_ref[R_G1:R_G1 + TILE_B, :HID]
    bt1 = p_ref[R_BT1:R_BT1 + TILE_B, :HID]
    w2 = p_ref[R_W2:R_W2 + HID, :]                            # (64, 128) (lanes>=80 zero)
    b2 = p_ref[R_B2:R_B2 + TILE_B, :]                         # (8, 128)
    gbc = p_ref[R_GBC:R_GBC + TILE_B, :DIM_H_ATAC]            # (8, 32)
    btbc = p_ref[R_BTBC:R_BTBC + TILE_B, :DIM_H_ATAC]
    wp = p_ref[R_WP:R_WP + 2 * CHUNK, :]                      # (32, 128) block-diag, lanes 48..87
    bp = p_ref[R_BP:R_BP + TILE_B, :]                         # (8, 128), lanes 48..87

    # shared decoder: Linear -> LN -> Mish -> (Dropout=id) -> Linear
    h = jnp.dot(z, w1, preferred_element_type=jnp.float32) + b1      # (8, 64)
    h = _mish_fast(_layer_norm(h, g1, bt1))
    s = jnp.dot(h, w2, preferred_element_type=jnp.float32) + b2      # (8, 128)
    # lanes 0..47 = rna hidden, lanes 48..79 = atac hidden, lanes 80..127 = 0

    # "atac": before_concat = LayerNorm -> relu -> Dropout(id), then the two
    # chunk-wise post decoders fused into one block-diagonal matmul whose
    # result lands directly in output lanes 48..87 (no concat needed).
    atac_h = s[:, DIM_H_RNA:TOTAL_HIDDEN]                     # (8, 32)
    a = jnp.maximum(_layer_norm(atac_h, gbc, btbc), 0.0)
    o = jnp.dot(a, wp, preferred_element_type=jnp.float32) + bp      # (8, 128)

    # distribution activations: rna -> exp (lanes 0..47), atac -> sigmoid
    # (lanes 48..87); remaining pad lanes forced to 0.  Single unmasked
    # lane-dense (8,128) store.
    lane = jax.lax.broadcasted_iota(jnp.int32, (TILE_B, LANE), 1)
    out_ref[...] = jnp.where(
        lane < DIM_H_RNA, jnp.exp(s),
        jnp.where(lane < OUT_TOTAL, jax.nn.sigmoid(o), 0.0))


# ---------------- parameter packing (run ONCE, off the forward path) --


def pack_params(p):
    """Pack all parameters into one sublane/lane-aligned (280, 128) f32 slab."""
    def rep8(v):                                   # replicate (1, N) -> (8, N)
        return jnp.broadcast_to(v, (8, v.shape[-1]))

    slab = jnp.zeros((PACK_ROWS, LANE), jnp.float32)
    slab = slab.at[R_W1:R_W1 + DIM_Z, :HID].set(p["w1"])       # rows DIM_Z..127 stay 0
    slab = slab.at[R_W2:R_W2 + HID, :TOTAL_HIDDEN].set(p["w2"])
    # block-diagonal fusion of the two post-decoder Linears, shifted so the
    # matmul output lands in lanes 48..87 of the 128-wide output block
    slab = slab.at[R_WP:R_WP + CHUNK,
                   DIM_H_RNA:DIM_H_RNA + DIMS_X["atac"][0]].set(p["wp0"])
    slab = slab.at[R_WP + CHUNK:R_WP + 2 * CHUNK,
                   DIM_H_RNA + DIMS_X["atac"][0]:OUT_TOTAL].set(p["wp1"])
    slab = slab.at[R_B1:R_B1 + 8, :HID].set(rep8(p["b1"]))
    slab = slab.at[R_G1:R_G1 + 8, :HID].set(rep8(p["g1"]))
    slab = slab.at[R_BT1:R_BT1 + 8, :HID].set(rep8(p["bt1"]))
    slab = slab.at[R_B2:R_B2 + 8, :TOTAL_HIDDEN].set(rep8(p["b2"]))
    slab = slab.at[R_GBC:R_GBC + 8, :DIM_H_ATAC].set(rep8(p["g_bc_atac"]))
    slab = slab.at[R_BTBC:R_BTBC + 8, :DIM_H_ATAC].set(rep8(p["bt_bc_atac"]))
    slab = slab.at[R_BP:R_BP + 8, DIM_H_RNA:OUT_TOTAL].set(
        rep8(jnp.concatenate([p["bp0"], p["bp1"]], axis=1)))
    return slab


# ---------------- wrapper (forward path) ------------------------------


@jax.jit
def decoder_forward(latent_data, slab):
    b = latent_data.shape[0]
    # lane-pad z so the LHS of the first matmul is a dense (8,128) tile
    z = jnp.pad(latent_data, ((0, 0), (0, LANE - DIM_Z)))

    cost = pl.CostEstimate(
        flops=2 * b * (LANE * HID + HID * LANE + 2 * CHUNK * LANE) + 40 * b * LANE,
        transcendentals=b * (HID + 2 * LANE),
        bytes_accessed=4 * (2 * b * LANE + PACK_ROWS * LANE),
    )
    out = pl.pallas_call(
        decoder_kernel,
        out_shape=jax.ShapeDtypeStruct((b, LANE), jnp.float32),
        grid_spec=pltpu.PrefetchScalarGridSpec(
            num_scalar_prefetch=0,
            grid=(b // TILE_B,),
            in_specs=[
                pl.BlockSpec((TILE_B, LANE), lambda i: (i, 0)),        # z batch tile
                pl.BlockSpec((PACK_ROWS, LANE), lambda i: (0, 0)),     # weights resident
            ],
            out_specs=pl.BlockSpec((TILE_B, LANE), lambda i: (i, 0)),
        ),
        compiler_params=pltpu.CompilerParams(
            dimension_semantics=("parallel",)),                        # 2 TCs on v7x
        cost_estimate=cost,
    )(z, slab)
    return {
        "rna": out[:, :DIMS_X["rna"][0]],
        "atac": out[:, DIMS_X["rna"][0]:OUT_TOTAL],
    }


# ---------------- pure-JAX reference (original formulation) ----------


def decoder_reference(z, p):
    h = z @ p["w1"] + p["b1"]
    h = _mish_ref(_layer_norm(h, p["g1"], p["bt1"]))
    s = h @ p["w2"] + p["b2"]
    rna_h = s[:, :DIM_H_RNA]
    atac_h = s[:, DIM_H_RNA:TOTAL_HIDDEN]
    a = jnp.maximum(_layer_norm(atac_h, p["g_bc_atac"], p["bt_bc_atac"]), 0.0)
    o0 = a[:, :CHUNK] @ p["wp0"] + p["bp0"]
    o1 = a[:, CHUNK:] @ p["wp1"] + p["bp1"]
    return {
        "rna": jnp.exp(rna_h),
        "atac": jax.nn.sigmoid(jnp.concatenate([o0, o1], axis=1)),
    }


# ---------------- deterministic parameter init ------------------------


def _init_linear(key, fan_in, fan_out):
    k_w, k_b = jax.random.split(key)
    bound = 1.0 / math.sqrt(fan_in)
    w = jax.random.uniform(k_w, (fan_in, fan_out), jnp.float32, -bound, bound)
    b = jax.random.uniform(k_b, (1, fan_out), jnp.float32, -bound, bound)
    return w, b


def make_params(key):
    k1, k2, k3, k4 = jax.random.split(key, 4)
    w1, b1 = _init_linear(k1, DIM_Z, HID)
    w2, b2 = _init_linear(k2, HID, TOTAL_HIDDEN)
    wp0, bp0 = _init_linear(k3, CHUNK, DIMS_X["atac"][0])
    wp1, bp1 = _init_linear(k4, CHUNK, DIMS_X["atac"][1])
    return {
        "w1": w1, "b1": b1,
        "g1": jnp.ones((1, HID), jnp.float32),
        "bt1": jnp.zeros((1, HID), jnp.float32),
        "w2": w2, "b2": b2,
        "g_bc_atac": jnp.ones((1, DIM_H_ATAC), jnp.float32),
        "bt_bc_atac": jnp.zeros((1, DIM_H_ATAC), jnp.float32),
        "wp0": wp0, "bp0": bp0,
        "wp1": wp1, "bp1": bp1,
    }


if __name__ == "__main__":
    key = jax.random.PRNGKey(0)
    k_param, k_z = jax.random.split(key)
    params = make_params(k_param)
    latent_data = jax.random.normal(k_z, (B, DIM_Z), jnp.float32)

    # slab is built ONCE (parameter-update time), not on the forward path
    slab = jax.block_until_ready(pack_params(params))

    out = decoder_forward(latent_data, slab)
    jax.block_until_ready(out)

    ref = decoder_reference(latent_data, params)
    for mod in out:
        assert out[mod].shape == ref[mod].shape, mod
        assert jnp.allclose(out[mod], ref[mod], rtol=2e-5, atol=2e-5), mod

    print("KERNEL_OK")
</pallas_src>

<mosaic_0001>
module attributes {stable_mosaic.version = 11 : i64} {
  func.func @decoder_kernel(%arg0: i32, %arg1: memref<8x128xf32, #tpu.memory_space<vmem>>, %arg2: memref<280x128xf32, #tpu.memory_space<vmem>>, %arg3: memref<8x128xf32, #tpu.memory_space<vmem>>) attributes {dimension_semantics = [#tpu.dimension_semantics<parallel>], iteration_bounds = array<i64: 2>, scalar_prefetch = 0 : i64, scratch_operands = 0 : i64, tpu.core_type = #tpu.core_type<tc>, window_params = [{transform_indices = @transform_0, window_bounds = array<i64: 8, 128>}, {pipeline_mode = #tpu.pipeline_mode<synchronous>, transform_indices = @transform_1, window_bounds = array<i64: 280, 128>}, {transform_indices = @transform_2, window_bounds = array<i64: 8, 128>}]} {
    %c0 = arith.constant 0 : index
    %c0_0 = arith.constant 0 : index
    %0 = vector.load %arg1[%c0, %c0_0] : memref<8x128xf32, #tpu.memory_space<vmem>>, vector<8x128xf32>
    %c0_1 = arith.constant 0 : index
    %c0_2 = arith.constant 0 : index
    %1 = vector.load %arg2[%c0_1, %c0_2] : memref<280x128xf32, #tpu.memory_space<vmem>>, vector<128x64xf32>
    %c224 = arith.constant 224 : index
    %c0_3 = arith.constant 0 : index
    %2 = vector.load %arg2[%c224, %c0_3] : memref<280x128xf32, #tpu.memory_space<vmem>>, vector<8x64xf32>
    %c232 = arith.constant 232 : index
    %c0_4 = arith.constant 0 : index
    %3 = vector.load %arg2[%c232, %c0_4] : memref<280x128xf32, #tpu.memory_space<vmem>>, vector<8x64xf32>
    %c240 = arith.constant 240 : index
    %c0_5 = arith.constant 0 : index
    %4 = vector.load %arg2[%c240, %c0_5] : memref<280x128xf32, #tpu.memory_space<vmem>>, vector<8x64xf32>
    %c128 = arith.constant 128 : index
    %c0_6 = arith.constant 0 : index
    %5 = vector.load %arg2[%c128, %c0_6] : memref<280x128xf32, #tpu.memory_space<vmem>>, vector<64x128xf32>
    %c248 = arith.constant 248 : index
    %c0_7 = arith.constant 0 : index
    %6 = vector.load %arg2[%c248, %c0_7] : memref<280x128xf32, #tpu.memory_space<vmem>>, vector<8x128xf32>
    %c256 = arith.constant 256 : index
    %c0_8 = arith.constant 0 : index
    %7 = vector.load %arg2[%c256, %c0_8] : memref<280x128xf32, #tpu.memory_space<vmem>>, vector<8x32xf32>
    %c264 = arith.constant 264 : index
    %c0_9 = arith.constant 0 : index
    %8 = vector.load %arg2[%c264, %c0_9] : memref<280x128xf32, #tpu.memory_space<vmem>>, vector<8x32xf32>
    %c192 = arith.constant 192 : index
    %c0_10 = arith.constant 0 : index
    %9 = vector.load %arg2[%c192, %c0_10] : memref<280x128xf32, #tpu.memory_space<vmem>>, vector<32x128xf32>
    %c272 = arith.constant 272 : index
    %c0_11 = arith.constant 0 : index
    %10 = vector.load %arg2[%c272, %c0_11] : memref<280x128xf32, #tpu.memory_space<vmem>>, vector<8x128xf32>
    %cst = arith.constant dense<0.000000e+00> : vector<8x64xf32>
    %11 = tpu.matmul %0, %1, %cst {dimension_numbers = #tpu.dot_dimension_numbers<[1], [0], [0], [1], [0, 0, 1, 1], [], []>} : vector<8x128xf32>, vector<128x64xf32>, vector<8x64xf32> -> vector<8x64xf32>
    %12 = arith.addf %11, %2 : vector<8x64xf32>
    %cst_12 = arith.constant dense<0.000000e+00> : vector<8xf32>
    %13 = vector.multi_reduction <add>, %12, %cst_12 [1] : vector<8x64xf32> to vector<8xf32>
    %14 = vector.shape_cast %13 : vector<8xf32> to vector<8x1xf32>
    %cst_13 = arith.constant 6.400000e+01 : f32
    %15 = vector.broadcast %cst_13 : f32 to vector<8x1xf32>
    %16 = arith.divf %14, %15 : vector<8x1xf32>
    %17 = vector.broadcast %16 : vector<8x1xf32> to vector<8x64xf32>
    %18 = arith.subf %12, %17 : vector<8x64xf32>
    %19 = arith.mulf %18, %18 : vector<8x64xf32>
    %cst_14 = arith.constant dense<0.000000e+00> : vector<8xf32>
    %20 = vector.multi_reduction <add>, %19, %cst_14 [1] : vector<8x64xf32> to vector<8xf32>
    %21 = vector.shape_cast %20 : vector<8xf32> to vector<8x1xf32>
    %cst_15 = arith.constant 6.400000e+01 : f32
    %22 = vector.broadcast %cst_15 : f32 to vector<8x1xf32>
    %23 = arith.divf %21, %22 : vector<8x1xf32>
    %24 = vector.broadcast %16 : vector<8x1xf32> to vector<8x64xf32>
    %25 = arith.subf %12, %24 : vector<8x64xf32>
    %cst_16 = arith.constant 9.99999974E-6 : f32
    %26 = vector.broadcast %cst_16 : f32 to vector<8x1xf32>
    %27 = arith.addf %23, %26 : vector<8x1xf32>
    %28 = math.rsqrt %27 : vector<8x1xf32>
    %29 = vector.broadcast %28 : vector<8x1xf32> to vector<8x64xf32>
    %30 = arith.mulf %25, %29 : vector<8x64xf32>
    %31 = arith.mulf %30, %3 : vector<8x64xf32>
    %32 = arith.addf %31, %4 : vector<8x64xf32>
    %33 = math.exp %32 : vector<8x64xf32>
    %cst_17 = arith.constant 1.000000e+00 : f32
    %34 = vector.broadcast %cst_17 : f32 to vector<8x64xf32>
    %35 = arith.addf %34, %33 : vector<8x64xf32>
    %36 = arith.mulf %35, %35 : vector<8x64xf32>
    %cst_18 = arith.constant 1.000000e+00 : f32
    %37 = vector.broadcast %cst_18 : f32 to vector<8x64xf32>
    %38 = arith.addf %36, %37 : vector<8x64xf32>
    %cst_19 = arith.constant 2.000000e+00 : f32
    %39 = vector.broadcast %cst_19 : f32 to vector<8x64xf32>
    %40 = arith.divf %39, %38 : vector<8x64xf32>
    %cst_20 = arith.constant 1.000000e+00 : f32
    %41 = vector.broadcast %cst_20 : f32 to vector<8x64xf32>
    %42 = arith.subf %41, %40 : vector<8x64xf32>
    %43 = arith.mulf %32, %42 : vector<8x64xf32>
    %cst_21 = arith.constant dense<0.000000e+00> : vector<8x128xf32>
    %44 = tpu.matmul %43, %5, %cst_21 {dimension_numbers = #tpu.dot_dimension_numbers<[1], [0], [0], [1], [0, 0, 1, 1], [], []>} : vector<8x64xf32>, vector<64x128xf32>, vector<8x128xf32> -> vector<8x128xf32>
    %45 = arith.addf %44, %6 : vector<8x128xf32>
    %46 = vector.extract_strided_slice %45 {offsets = [0, 48], sizes = [8, 32], strides = [1, 1]} : vector<8x128xf32> to vector<8x32xf32>
    %cst_22 = arith.constant dense<0.000000e+00> : vector<8xf32>
    %47 = vector.multi_reduction <add>, %46, %cst_22 [1] : vector<8x32xf32> to vector<8xf32>
    %48 = vector.shape_cast %47 : vector<8xf32> to vector<8x1xf32>
    %cst_23 = arith.constant 3.200000e+01 : f32
    %49 = vector.broadcast %cst_23 : f32 to vector<8x1xf32>
    %50 = arith.divf %48, %49 : vector<8x1xf32>
    %51 = vector.broadcast %50 : vector<8x1xf32> to vector<8x32xf32>
    %52 = arith.subf %46, %51 : vector<8x32xf32>
    %53 = arith.mulf %52, %52 : vector<8x32xf32>
    %cst_24 = arith.constant dense<0.000000e+00> : vector<8xf32>
    %54 = vector.multi_reduction <add>, %53, %cst_24 [1] : vector<8x32xf32> to vector<8xf32>
    %55 = vector.shape_cast %54 : vector<8xf32> to vector<8x1xf32>
    %cst_25 = arith.constant 3.200000e+01 : f32
    %56 = vector.broadcast %cst_25 : f32 to vector<8x1xf32>
    %57 = arith.divf %55, %56 : vector<8x1xf32>
    %58 = vector.broadcast %50 : vector<8x1xf32> to vector<8x32xf32>
    %59 = arith.subf %46, %58 : vector<8x32xf32>
    %cst_26 = arith.constant 9.99999974E-6 : f32
    %60 = vector.broadcast %cst_26 : f32 to vector<8x1xf32>
    %61 = arith.addf %57, %60 : vector<8x1xf32>
    %62 = math.rsqrt %61 : vector<8x1xf32>
    %63 = vector.broadcast %62 : vector<8x1xf32> to vector<8x32xf32>
    %64 = arith.mulf %59, %63 : vector<8x32xf32>
    %65 = arith.mulf %64, %7 : vector<8x32xf32>
    %66 = arith.addf %65, %8 : vector<8x32xf32>
    %cst_27 = arith.constant 0.000000e+00 : f32
    %67 = vector.broadcast %cst_27 : f32 to vector<8x32xf32>
    %68 = arith.maximumf %66, %67 : vector<8x32xf32>
    %cst_28 = arith.constant dense<0.000000e+00> : vector<8x128xf32>
    %69 = tpu.matmul %68, %9, %cst_28 {dimension_numbers = #tpu.dot_dimension_numbers<[1], [0], [0], [1], [0, 0, 1, 1], [], []>} : vector<8x32xf32>, vector<32x128xf32>, vector<8x128xf32> -> vector<8x128xf32>
    %70 = arith.addf %69, %10 : vector<8x128xf32>
    %71 = tpu.iota {dimensions = array<i32: 1>} : vector<8x128xi32>
    %c48_i32 = arith.constant 48 : i32
    %72 = vector.broadcast %c48_i32 : i32 to vector<8x128xi32>
    %73 = arith.cmpi slt, %71, %72 : vector<8x128xi32>
    %74 = math.exp %45 : vector<8x128xf32>
    %c88_i32 = arith.constant 88 : i32
    %75 = vector.broadcast %c88_i32 : i32 to vector<8x128xi32>
    %76 = arith.cmpi slt, %71, %75 : vector<8x128xi32>
    %77 = arith.negf %70 : vector<8x128xf32>
    %78 = math.exp %77 : vector<8x128xf32>
    %cst_29 = arith.constant 1.000000e+00 : f32
    %79 = vector.broadcast %cst_29 : f32 to vector<8x128xf32>
    %80 = arith.addf %79, %78 : vector<8x128xf32>
    %81 = arith.divf %79, %80 : vector<8x128xf32>
    %cst_30 = arith.constant 0.000000e+00 : f32
    %82 = vector.broadcast %cst_30 : f32 to vector<8x128xf32>
    %83 = arith.select %76, %81, %82 : vector<8x128xi1>, vector<8x128xf32>
    %84 = arith.select %73, %74, %83 : vector<8x128xi1>, vector<8x128xf32>
    %c0_31 = arith.constant 0 : index
    %c0_32 = arith.constant 0 : index
    %85 = vector.load %arg3[%c0_31, %c0_32] : memref<8x128xf32, #tpu.memory_space<vmem>>, vector<8x128xf32>
    tpu.vector_store %arg3[%c0_31, %c0_32], %84 {strides = array<i32>} : memref<8x128xf32, #tpu.memory_space<vmem>>, vector<8x128xf32>,
    return
  }
  func.func @transform_0(%arg0: i32) -> (i32, i32) {
    %c0_i32 = arith.constant 0 : i32
    %c0_i32_0 = arith.constant 0 : i32
    return %arg0, %c0_i32 : i32, i32
  }
  func.func @transform_1(%arg0: i32) -> (i32, i32) {
    %c0_i32 = arith.constant 0 : i32
    %c0_i32_0 = arith.constant 0 : i32
    %c0_i32_1 = arith.constant 0 : i32
    return %c0_i32, %c0_i32_0 : i32, i32
  }
  func.func @transform_2(%arg0: i32) -> (i32, i32) {
    %c0_i32 = arith.constant 0 : i32
    %c0_i32_0 = arith.constant 0 : i32
    return %arg0, %c0_i32 : i32, i32
  }
}

</mosaic_0001>

<llo_original>
// kernel: decoder_forward.1
$region0: #{decoder_forward.1}
  #allocation0 [shape = 'u32[]', space=smem, size = 0x4, offset = 0x4, fixed_abs, tag = 'smem constant byte address 0x4 - core index']
  #allocation1 [shape = 'u32[144,128]{1,0:T(1,128)}', space=vmem, size = 0x12000, scoped, tag = 'internal scratch']
  %s0 = inlined_call_operand.vmem [shape: f32[16,128], index: 0, kind: input, shape index: {}]
  %s1 = inlined_call_operand.hbm [shape: f32[280,128], index: 1, kind: input, shape index: {}]
  %s2 = inlined_call_operand.vmem [shape: f32[16,128], index: 2, kind: output, shape index: {}]
  %s3 = sld [smem:[#allocation0]]
  $region45: #{decoder_forward.1} parent=0
    _
  %s5 = ssub.s32 1, %s3
  %s6 = scalar_select 0, %s5, %s3
  $region1: #{decoder_forward.1} parent=0
    #allocation2 [shape = 'u8[143360]{0}', space=vmem, size = 0x23000, scoped, tag = 'input window, operand 1, single buffered']
    #allocation3 [shape = 's32[2]{0}', space=sflag, size = 0x8, scoped, tag = 'scoped memory for decoder_forward.1']
    %7 = vsyncpa [#allocation3], 0
    loop: start=0, step=1, limit=4
    $region2: #{decoder_forward.1} parent=1 // loop_pre_header
      _
    $region3: #{decoder_forward.1} parent=1 // loop_header
      %s9 = sphi 0, %s13
      %p10 = scmp.ge.s32.totalorder %s9, 4
      %s19 = sphi 0, %s21
      %s22 = sphi 0, %s19
      %s23 = sphi 0, %s22
      %s39 = sphi 0, %s23
      %s43 = sphi 0, %s43
      %s45 = sphi 0, %s43
      %s46 = sphi 0, %s45
      %s60 = sphi 0, %s46
      %s66 = sphi 0, %s68
      %s69 = sphi 0, %s66
      %s70 = sphi 0, %s69
      %s86 = sphi 0, %s70
    $region4: #{decoder_forward.1} parent=1 // loop_header_branch
      %12 = sbr.rel (%p10) target = $region8
    $region5: #{decoder_forward.1} parent=1 // loop_body
      %s14 = ssub.s32 %s9, 1
      %s15 = ssub.s32 %s9, 2
      %s16 = sadd.s32 %s9, 1
      %s17 = ssub.s32 %s9, %s16
      %p18 = scmp.eq.s32.totalorder %s17, 0
      %s20 = sadd.s32 %s19, 1
      %s21 = scalar_select %p18, %s19, %s20
      %p24 = pneg %p18
      %p25 = scmp.eq.s32.totalorder %s9, 1
      %p26 = por %p24, %p25
      %p27 = scmp.ne.s32.totalorder %s19, %s22
      %p28 = scmp.eq.s32.totalorder %s9, 0
      %p29 = por %p27, %p28
      %p30 = scmp.ne.s32.totalorder %s19, %s22
      %p31 = scmp.eq.s32.totalorder %s14, 1
      %p32 = por %p30, %p31
      %p33 = scmp.ne.s32.totalorder %s22, %s23
      %p34 = scmp.eq.s32.totalorder %s14, 0
      %p35 = por %p33, %p34
      %p36 = scmp.ne.s32.totalorder %s22, %s23
      %p37 = scmp.eq.s32.totalorder %s15, 1
      %p38 = por %p36, %p37
      %p40 = scmp.ne.s32.totalorder %s23, %s39
      %p41 = scmp.eq.s32.totalorder %s15, 0
      %p42 = por %p40, %p41
      %s44 = sadd.s32 %s43, 1
      %p47 = scmp.eq.s32.totalorder %s9, 1
      %p48 = scmp.ne.s32.totalorder %s43, %s45
      %p49 = scmp.eq.s32.totalorder %s9, 0
      %p50 = por %p48, %p49
      %p51 = scmp.ne.s32.totalorder %s43, %s45
      %p52 = scmp.eq.s32.totalorder %s14, 1
      %p53 = por %p51, %p52
      %p54 = scmp.ne.s32.totalorder %s45, %s46
      %p55 = scmp.eq.s32.totalorder %s14, 0
      %p56 = por %p54, %p55
      %p57 = scmp.ne.s32.totalorder %s45, %s46
      %p58 = scmp.eq.s32.totalorder %s15, 1
      %p59 = por %p57, %p58
      %p61 = scmp.ne.s32.totalorder %s46, %s60
      %p62 = scmp.eq.s32.totalorder %s15, 0
      %p63 = por %p61, %p62
      %s64 = ssub.s32 %s9, %s16
      %p65 = scmp.eq.s32.totalorder %s64, 0
      %s67 = sadd.s32 %s66, 1
      %s68 = scalar_select %p65, %s66, %s67
      %p71 = pneg %p65
      %p72 = scmp.eq.s32.totalorder %s9, 1
      %p73 = por %p71, %p72
      %p74 = scmp.ne.s32.totalorder %s66, %s69
      %p75 = scmp.eq.s32.totalorder %s9, 0
      %p76 = por %p74, %p75
      %p77 = scmp.ne.s32.totalorder %s66, %s69
      %p78 = scmp.eq.s32.totalorder %s14, 1
      %p79 = por %p77, %p78
      %p80 = scmp.ne.s32.totalorder %s69, %s70
      %p81 = scmp.eq.s32.totalorder %s14, 0
      %p82 = por %p80, %p81
      %p83 = scmp.ne.s32.totalorder %s69, %s70
      %p84 = scmp.eq.s32.totalorder %s15, 1
      %p85 = por %p83, %p84
      %p87 = scmp.ne.s32.totalorder %s70, %s86
      %p88 = scmp.eq.s32.totalorder %s15, 0
      %p89 = por %p87, %p88
      %p90 = scmp.le.s32.totalorder 1, %s9
      %p91 = scmp.lt.s32.totalorder %s9, 3
      %p92 = pnand %p90, %p91
      %p93 = pneg %p92
      // Predicated region
      $region9: #{decoder_forward.1} parent=5 // pred_check
        _
      $region10: #{decoder_forward.1} parent=5 // pred_check_branch
        %95 = sbr.rel (%p92) target = $region12
      $region11: #{decoder_forward.1} parent=5 // pred_region
        %s96 = ssub.s32 %s9, 1
        // Predicated region
        $region13: #{decoder_forward.1} parent=11 // pred_check
          %p97 = pneg %p56
        $region14: #{decoder_forward.1} parent=11 // pred_check_branch
          %99 = sbr.rel (%p97) target = $region16
        $region15: #{decoder_forward.1} parent=11 // pred_region
          %s101 = ssub.s32 4480, 4480
          %102 = vsyncadd [#allocation3], %s101
          %s103 = sshll.u32 [#allocation2], 4
          %s104 = int_to_ptr.vmem [resolvable:$true] %s103
          %109 = dma.hbm_to_vmem [thread:$0]  %s1, 4480, %s104, [#allocation3], 128, 128, 8
        $region16: #{decoder_forward.1} parent=11 // pred_fallthru
          _
      $region12: #{decoder_forward.1} parent=5 // pred_fallthru
        _
      %p110 = scmp.lt.s32.totalorder %s9, 2
      // Predicated region
      $region17: #{decoder_forward.1} parent=5 // pred_check
        %p111 = pneg %p110
      $region18: #{decoder_forward.1} parent=5 // pred_check_branch
        %113 = sbr.rel (%p111) target = $region20
      $region19: #{decoder_forward.1} parent=5 // pred_region
        // Predicated region
        $region21: #{decoder_forward.1} parent=19 // pred_check
          %p114 = pneg %p29
        $region22: #{decoder_forward.1} parent=19 // pred_check_branch
          %116 = sbr.rel (%p114) target = $region24
        $region23: #{decoder_forward.1} parent=19 // pred_region
          %p117 = scmp.lt.s32.totalorder %s9, 1
          %s118 = scalar_select %p117, %s9, 1
          %s119 = smul.addr %s118, 8
          %s120 = scalar_lea.vmem %s0, %s119
        $region24: #{decoder_forward.1} parent=19 // pred_fallthru
          _
      $region20: #{decoder_forward.1} parent=5 // pred_fallthru
        _
      %p121 = scmp.le.s32.totalorder 1, %s9
      %p122 = scmp.lt.s32.totalorder %s9, 3
      %p123 = pnand %p121, %p122
      %p124 = pneg %p123
      // Predicated region
      $region25: #{decoder_forward.1} parent=5 // pred_check
        _
      $region26: #{decoder_forward.1} parent=5 // pred_check_branch
        %126 = sbr.rel (%p123) target = $region28
      $region27: #{decoder_forward.1} parent=5 // pred_region
        %s127 = ssub.s32 %s9, 1
        // Predicated region
        $region29: #{decoder_forward.1} parent=27 // pred_check
          %p128 = pneg %p56
        $region30: #{decoder_forward.1} parent=27 // pred_check_branch
          %130 = sbr.rel (%p128) target = $region32
        $region31: #{decoder_forward.1} parent=27 // pred_region
          %131 = dma.done [#allocation3], 4480
        $region32: #{decoder_forward.1} parent=27 // pred_fallthru
          _
        %p132 = scmp.lt.s32.totalorder %s14, 1
        %s133 = scalar_select %p132, %s14, 1
        %s134 = smul.addr %s133, 8
        %s135 = scalar_lea.vmem %s0, %s134
        %p136 = pneg %p35
        %p137 = pneg %p32
        %p138 = pneg %p56
        %p139 = pneg %p53
        %p140 = pneg %p82
        %p141 = pneg %p79
        %p142 = scmp.lt.s32.totalorder %s14, 1
        %s143 = scalar_select %p142, %s14, 1
        %s144 = smul.addr %s143, 8
        %s145 = scalar_lea.vmem %s2, %s144
        %p146 = scmp.lt.s32.totalorder %s14, 1
        %s147 = scalar_select %p146, %s14, 1
        %s148 = smul.addr %s147, 8
        %s149 = scalar_lea.vmem %s0, %s148
        %p150 = scmp.lt.s32.totalorder %s14, 1
        %s151 = scalar_select %p150, %s14, 1
        %s152 = smul.addr %s151, 8
        %s153 = scalar_lea.vmem %s2, %s152
        %v154 = vld [vmem:[%s149] sm:$0xff]
        %v155 = vld [vmem:[#allocation2] sm:$0xff]
        %v156 = vld [vmem:[#allocation2 + $0x8] sm:$0xff]
        %v157 = vld [vmem:[#allocation2 + $0x10] sm:$0xff]
        %v158 = vld [vmem:[#allocation2 + $0x18] sm:$0xff]
        %v159 = vld [vmem:[#allocation2 + $0x20] sm:$0xff]
        %v160 = vld [vmem:[#allocation2 + $0x28] sm:$0xff]
        %v161 = vld [vmem:[#allocation2 + $0x30] sm:$0xff]
        %v162 = vld [vmem:[#allocation2 + $0x38] sm:$0xff]
        %v163 = vld [vmem:[#allocation2 + $0x40] sm:$0xff]
        %v164 = vld [vmem:[#allocation2 + $0x48] sm:$0xff]
        %v165 = vld [vmem:[#allocation2 + $0x50] sm:$0xff]
        %v166 = vld [vmem:[#allocation2 + $0x58] sm:$0xff]
        %v167 = vld [vmem:[#allocation2 + $0x60] sm:$0xff]
        %v168 = vld [vmem:[#allocation2 + $0x68] sm:$0xff]
        %v169 = vld [vmem:[#allocation2 + $0x70] sm:$0xff]
        %v170 = vld [vmem:[#allocation2 + $0x78] sm:$0xff]
        %v171 = vld [vmem:[#allocation2 + $0xe0] sm:$0xff]
        %v172 = vld [vmem:[#allocation2 + $0xe8] sm:$0xff]
        %v173 = vld [vmem:[#allocation2 + $0xf0] sm:$0xff]
        %v174 = vld [vmem:[#allocation2 + $0x80] sm:$0xff]
        %v175 = vld [vmem:[#allocation2 + $0x88] sm:$0xff]
        %v176 = vld [vmem:[#allocation2 + $0x90] sm:$0xff]
        %v177 = vld [vmem:[#allocation2 + $0x98] sm:$0xff]
        %v178 = vld [vmem:[#allocation2 + $0xa0] sm:$0xff]
        %v179 = vld [vmem:[#allocation2 + $0xa8] sm:$0xff]
        %v180 = vld [vmem:[#allocation2 + $0xb0] sm:$0xff]
        %v181 = vld [vmem:[#allocation2 + $0xb8] sm:$0xff]
        %v182 = vld [vmem:[#allocation2 + $0xf8] sm:$0xff]
        %v183 = vld [vmem:[#allocation2 + $0x100] sm:$0xff]
        %v184 = vld [vmem:[#allocation2 + $0x108] sm:$0xff]
        %v185 = vld [vmem:[#allocation2 + $0xc0] sm:$0xff]
        %v186 = vld [vmem:[#allocation2 + $0xc8] sm:$0xff]
        %v187 = vld [vmem:[#allocation2 + $0xd0] sm:$0xff]
        %v188 = vld [vmem:[#allocation2 + $0xd8] sm:$0xff]
        %v189 = vld [vmem:[#allocation2 + $0x110] sm:$0xff]
        %190 = vmatprep.subr.mxu0 0.0
        %191 = vmatpush1.msra.mxu0 %v170
        %192 = vmatprep.subr.mxu0 0.0
        %193 = vmatpush1.msra.mxu0 %v169
        %194 = vmatprep.subr.mxu0 0.0
        %195 = vmatpush1.msra.mxu0 %v168
        %196 = vmatprep.subr.mxu0 0.0
        %197 = vmatpush1.msra.mxu0 %v167
        %198 = vmatprep.subr.mxu0 0.0
        %199 = vmatpush1.msra.mxu0 %v166
        %200 = vmatprep.subr.mxu0 0.0
        %201 = vmatpush1.msra.mxu0 %v165
        %202 = vmatprep.subr.mxu0 0.0
        %203 = vmatpush1.msra.mxu0 %v164
        %204 = vmatprep.subr.mxu0 0.0
        %205 = vmatpush1.msra.mxu0 %v163
        %206 = vmatprep.subr.mxu0 0.0
        %207 = vmatpush1.msra.mxu0 %v162
        %208 = vmatprep.subr.mxu0 0.0
        %209 = vmatpush1.msra.mxu0 %v161
        %210 = vmatprep.subr.mxu0 0.0
        %211 = vmatpush1.msra.mxu0 %v160
        %212 = vmatprep.subr.mxu0 0.0
        %213 = vmatpush1.msra.mxu0 %v159
        %214 = vmatprep.subr.mxu0 0.0
        %215 = vmatpush1.msra.mxu0 %v158
        %216 = vmatprep.subr.mxu0 0.0
        %217 = vmatpush1.msra.mxu0 %v157
        %218 = vmatprep.subr.mxu0 0.0
        %219 = vmatpush1.msra.mxu0 %v156
        %220 = vmatprep.subr.mxu0 0.0
        %221 = vmatpush1.msra.mxu0 %v155
        %222 = vmatprep.subr.mxu0 0.0
        %223 = vmatpush2.msra.mxu0 0.0
        %224 = vmatprep.subr.mxu0 0.0
        %225 = vmatpush2.msra.mxu0 0.0
        %226 = vmatprep.subr.mxu0 0.0
        %227 = vmatpush2.msra.mxu0 0.0
        %228 = vmatprep.subr.mxu0 0.0
        %229 = vmatpush2.msra.mxu0 0.0
        %230 = vmatprep.subr.mxu0 0.0
        %231 = vmatpush2.msra.mxu0 0.0
        %232 = vmatprep.subr.mxu0 0.0
        %233 = vmatpush2.msra.mxu0 0.0
        %234 = vmatprep.subr.mxu0 0.0
        %235 = vmatpush2.msra.mxu0 0.0
        %236 = vmatprep.subr.mxu0 0.0
        %237 = vmatpush2.msra.mxu0 0.0
        %238 = vmatprep.subr.mxu0 0.0
        %239 = vmatpush2.msra.mxu0 0.0
        %240 = vmatprep.subr.mxu0 0.0
        %241 = vmatpush2.msra.mxu0 0.0
        %242 = vmatprep.subr.mxu0 0.0
        %243 = vmatpush2.msra.mxu0 0.0
        %244 = vmatprep.subr.mxu0 0.0
        %245 = vmatpush2.msra.mxu0 0.0
        %246 = vmatprep.subr.mxu0 0.0
        %247 = vmatpush2.msra.mxu0 0.0
        %248 = vmatprep.subr.mxu0 0.0
        %249 = vmatpush2.msra.mxu0 0.0
        %250 = vmatprep.subr.mxu0 0.0
        %251 = vmatpush2.msra.mxu0 0.0
        %252 = vmatprep.subr.mxu0 0.0
        %253 = vmatpush2.msra.mxu0 0.0
        %254 = vmatprep.mubr.f32.mxu0 0.0
        %255 = vmatmul.mubr.f32.gmra.mxu0 %v154
        %v256 = vpop.f32.mrf.mxu0
        %v257 = vadd.f32 %v171, %v256
        %v258 = vpop.f32.mrf.mxu0
        %259 = vdwg.mxu0
        %vm260 = vcmask 523264
        %v261 = vsel %vm260, %v257, 0.0
        %262 = vadd.xlane.f32.xlu0 %v261
        %v263 = vpop.xlane.xlu0 %262
        %v264 = vrcp.pop 64.0
        %v265 = vmul.f32 %v263, %v264
        %v266 = vsub.f32 %v257, %v265
        %v267 = vmul.f32 %v266, %v266
        %v268 = vsel %vm260, %v267, 0.0
        %269 = vadd.xlane.f32.xlu0 %v268
        %v270 = vpop.xlane.xlu0 %269
        %v271 = vmul.f32 %v270, %v264
        %v272 = vadd.f32 %v271, 1e-05
        %v273 = vrsqrt.pop %v272
        %v274 = vmul.f32 %v266, %v273
        %v275 = vmul.f32 %v274, %v172
        %v276 = vadd.f32 %v275, %v173
        %v277 = vmul.f32 %v276, 1.442695
        %v278 = vpow.pop %v277
        %v279 = vadd.f32 %v278, 1.0
        %v280 = vmul.f32 %v279, %v279
        %v281 = vadd.f32 %v280, 1.0
        %v282 = vrcp.pop %v281
        %v283 = vmul.f32 2.0, %v282
        %v284 = vsub.f32 1.0, %v283
        %v285 = vmul.f32 %v276, %v284
        %v287 = vsel %vm260, %v285, 0
        %289 = vmatprep.subr.mxu0 0.0
        %290 = vmatpush1.msra.mxu0 0.0
        %291 = vmatprep.subr.mxu0 0.0
        %292 = vmatpush1.msra.mxu0 0.0
        %293 = vmatprep.subr.mxu0 0.0
        %294 = vmatpush1.msra.mxu0 0.0
        %295 = vmatprep.subr.mxu0 0.0
        %296 = vmatpush1.msra.mxu0 0.0
        %297 = vmatprep.subr.mxu0 0.0
        %298 = vmatpush1.msra.mxu0 0.0
        %299 = vmatprep.subr.mxu0 0.0
        %300 = vmatpush1.msra.mxu0 0.0
        %301 = vmatprep.subr.mxu0 0.0
        %302 = vmatpush1.msra.mxu0 0.0
        %303 = vmatprep.subr.mxu0 0.0
        %304 = vmatpush1.msra.mxu0 0.0
        %305 = vmatprep.subr.mxu0 0.0
        %306 = vmatpush1.msra.mxu0 %v181
        %307 = vmatprep.subr.mxu0 0.0
        %308 = vmatpush1.msra.mxu0 %v180
        %309 = vmatprep.subr.mxu0 0.0
        %310 = vmatpush1.msra.mxu0 %v179
        %311 = vmatprep.subr.mxu0 0.0
        %312 = vmatpush1.msra.mxu0 %v178
        %313 = vmatprep.subr.mxu0 0.0
        %314 = vmatpush1.msra.mxu0 %v177
        %315 = vmatprep.subr.mxu0 0.0
        %316 = vmatpush1.msra.mxu0 %v176
        %317 = vmatprep.subr.mxu0 0.0
        %318 = vmatpush1.msra.mxu0 %v175
        %319 = vmatprep.subr.mxu0 0.0
        %320 = vmatpush1.msra.mxu0 %v174
        %321 = vmatprep.subr.mxu0 0.0
        %322 = vmatpush2.msra.mxu0 0.0
        %323 = vmatprep.subr.mxu0 0.0
        %324 = vmatpush2.msra.mxu0 0.0
        %325 = vmatprep.subr.mxu0 0.0
        %326 = vmatpush2.msra.mxu0 0.0
        %327 = vmatprep.subr.mxu0 0.0
        %328 = vmatpush2.msra.mxu0 0.0
        %329 = vmatprep.subr.mxu0 0.0
        %330 = vmatpush2.msra.mxu0 0.0
        %331 = vmatprep.subr.mxu0 0.0
        %332 = vmatpush2.msra.mxu0 0.0
        %333 = vmatprep.subr.mxu0 0.0
        %334 = vmatpush2.msra.mxu0 0.0
        %335 = vmatprep.subr.mxu0 0.0
        %336 = vmatpush2.msra.mxu0 0.0
        %337 = vmatprep.subr.mxu0 0.0
        %338 = vmatpush2.msra.mxu0 0.0
        %339 = vmatprep.subr.mxu0 0.0
        %340 = vmatpush2.msra.mxu0 0.0
        %341 = vmatprep.subr.mxu0 0.0
        %342 = vmatpush2.msra.mxu0 0.0
        %343 = vmatprep.subr.mxu0 0.0
        %344 = vmatpush2.msra.mxu0 0.0
        %345 = vmatprep.subr.mxu0 0.0
        %346 = vmatpush2.msra.mxu0 0.0
        %347 = vmatprep.subr.mxu0 0.0
        %348 = vmatpush2.msra.mxu0 0.0
        %349 = vmatprep.subr.mxu0 0.0
        %350 = vmatpush2.msra.mxu0 0.0
        %351 = vmatprep.subr.mxu0 0.0
        %352 = vmatpush2.msra.mxu0 0.0
        %353 = vmatprep.mubr.f32.mxu0 0.0
        %354 = vmatmul.mubr.f32.gmra.mxu0 %v287
        %v355 = vpop.f32.mrf.mxu0
        %v356 = vadd.f32 %v182, %v355
        %v357 = vpop.f32.mrf.mxu0
        %358 = vdwg.mxu0
        %360 = vrot.lane.b32.xlu0 %v356, 80
        %v361 = vpop.permute.xlu0 %360
        %vm363 = vcmask 261120
        %v364 = vsel %vm363, %v361, 0.0
        %365 = vadd.xlane.f32.xlu0 %v364
        %v366 = vpop.xlane.xlu0 %365
        %v367 = vrcp.pop 32.0
        %v368 = vmul.f32 %v366, %v367
        %v369 = vsub.f32 %v356, %v368
        %v370 = vmul.f32 %v369, %v369
        %372 = vrot.lane.b32.xlu0 %v370, 80
        %v373 = vpop.permute.xlu0 %372
        %v375 = vsel %vm363, %v373, 0.0
        %376 = vadd.xlane.f32.xlu0 %v375
        %v377 = vpop.xlane.xlu0 %376
        %v378 = vmul.f32 %v377, %v367
        %v379 = vadd.f32 %v378, 1e-05
        %v380 = vrsqrt.pop %v379
        %v381 = vmul.f32 %v369, %v380
        %383 = vrot.lane.b32.xlu0 %v183, 48
        %v384 = vpop.permute.xlu0 %383
        %v386 = vmul.f32 %v381, %v384
        %388 = vrot.lane.b32.xlu0 %v184, 48
        %v389 = vpop.permute.xlu0 %388
        %v391 = vadd.f32 %v386, %v389
        %v392 = vmax.f32 %v391, 0.0
        %394 = vrot.lane.b32.xlu0 %v392, 80
        %v395 = vpop.permute.xlu0 %394
        %v396 = vsel %vm363, %v395, 0
        %398 = vmatprep.subr.mxu0 0.0
        %399 = vmatpush1.msra.mxu0 0.0
        %400 = vmatprep.subr.mxu0 0.0
        %401 = vmatpush1.msra.mxu0 0.0
        %402 = vmatprep.subr.mxu0 0.0
        %403 = vmatpush1.msra.mxu0 0.0
        %404 = vmatprep.subr.mxu0 0.0
        %405 = vmatpush1.msra.mxu0 0.0
        %406 = vmatprep.subr.mxu0 0.0
        %407 = vmatpush1.msra.mxu0 0.0
        %408 = vmatprep.subr.mxu0 0.0
        %409 = vmatpush1.msra.mxu0 0.0
        %410 = vmatprep.subr.mxu0 0.0
        %411 = vmatpush1.msra.mxu0 0.0
        %412 = vmatprep.subr.mxu0 0.0
        %413 = vmatpush1.msra.mxu0 0.0
        %414 = vmatprep.subr.mxu0 0.0
        %415 = vmatpush1.msra.mxu0 0.0
        %416 = vmatprep.subr.mxu0 0.0
        %417 = vmatpush1.msra.mxu0 0.0
        %418 = vmatprep.subr.mxu0 0.0
        %419 = vmatpush1.msra.mxu0 0.0
        %420 = vmatprep.subr.mxu0 0.0
        %421 = vmatpush1.msra.mxu0 0.0
        %422 = vmatprep.subr.mxu0 0.0
        %423 = vmatpush1.msra.mxu0 %v188
        %424 = vmatprep.subr.mxu0 0.0
        %425 = vmatpush1.msra.mxu0 %v187
        %426 = vmatprep.subr.mxu0 0.0
        %427 = vmatpush1.msra.mxu0 %v186
        %428 = vmatprep.subr.mxu0 0.0
        %429 = vmatpush1.msra.mxu0 %v185
        %430 = vmatprep.subr.mxu0 0.0
        %431 = vmatpush2.msra.mxu0 0.0
        %432 = vmatprep.subr.mxu0 0.0
        %433 = vmatpush2.msra.mxu0 0.0
        %434 = vmatprep.subr.mxu0 0.0
        %435 = vmatpush2.msra.mxu0 0.0
        %436 = vmatprep.subr.mxu0 0.0
        %437 = vmatpush2.msra.mxu0 0.0
        %438 = vmatprep.subr.mxu0 0.0
        %439 = vmatpush2.msra.mxu0 0.0
        %440 = vmatprep.subr.mxu0 0.0
        %441 = vmatpush2.msra.mxu0 0.0
        %442 = vmatprep.subr.mxu0 0.0
        %443 = vmatpush2.msra.mxu0 0.0
        %444 = vmatprep.subr.mxu0 0.0
        %445 = vmatpush2.msra.mxu0 0.0
        %446 = vmatprep.subr.mxu0 0.0
        %447 = vmatpush2.msra.mxu0 0.0
        %448 = vmatprep.subr.mxu0 0.0
        %449 = vmatpush2.msra.mxu0 0.0
        %450 = vmatprep.subr.mxu0 0.0
        %451 = vmatpush2.msra.mxu0 0.0
        %452 = vmatprep.subr.mxu0 0.0
        %453 = vmatpush2.msra.mxu0 0.0
        %454 = vmatprep.subr.mxu0 0.0
        %455 = vmatpush2.msra.mxu0 0.0
        %456 = vmatprep.subr.mxu0 0.0
        %457 = vmatpush2.msra.mxu0 0.0
        %458 = vmatprep.subr.mxu0 0.0
        %459 = vmatpush2.msra.mxu0 0.0
        %460 = vmatprep.subr.mxu0 0.0
        %461 = vmatpush2.msra.mxu0 0.0
        %462 = vmatprep.mubr.f32.mxu0 0.0
        %463 = vmatmul.mubr.f32.gmra.mxu0 %v396
        %v464 = vpop.f32.mrf.mxu0
        %v465 = vadd.f32 %v189, %v464
        %v466 = vpop.f32.mrf.mxu0
        %467 = vdwg.mxu0
        %v468 = vlaneseq
        %v469 = vand.u32 %v468, 127
        %vm470 = vcmp.lt.s32.totalorder %v469, 48
        %v471 = vmul.f32 %v356, 1.442695
        %v472 = vpow.pop %v471
        %vm473 = vcmp.lt.s32.totalorder %v469, 88
        %v474 = vxor.u32 %v465, 2147483648
        %v475 = vmul.f32 %v474, 1.442695
        %v476 = vpow.pop %v475
        %v477 = vadd.f32 %v476, 1.0
        %v478 = vrcp.pop %v477
        %v479 = vmul.f32 1.0, %v478
        %v480 = vsel %vm473, %v479, 0.0
        %v481 = vsel %vm470, %v472, %v480
        %482 = vst [vmem:[%s153] sm:$0xff] %v481
        %p483 = scmp.lt.s32.totalorder %s14, 1
        %s484 = scalar_select %p483, %s14, 1
        %s485 = smul.addr %s484, 8
        %s486 = scalar_lea.vmem %s2, %s485
        // Predicated region
        $region33: #{decoder_forward.1} parent=27 // pred_check
          %p487 = pneg %p79
        $region34: #{decoder_forward.1} parent=27 // pred_check_branch
          %489 = sbr.rel (%p487) target = $region36
        $region35: #{decoder_forward.1} parent=27 // pred_region
          _
        $region36: #{decoder_forward.1} parent=27 // pred_fallthru
          _
      $region28: #{decoder_forward.1} parent=5 // pred_fallthru
        _
      %p490 = scmp.le.s32.totalorder 2, %s9
      // Predicated region
      $region37: #{decoder_forward.1} parent=5 // pred_check
        %p491 = pneg %p490
      $region38: #{decoder_forward.1} parent=5 // pred_check_branch
        %493 = sbr.rel (%p491) target = $region40
      $region39: #{decoder_forward.1} parent=5 // pred_region
        %s494 = ssub.s32 %s9, 2
        // Predicated region
        $region41: #{decoder_forward.1} parent=39 // pred_check
          %p495 = pneg %p85
        $region42: #{decoder_forward.1} parent=39 // pred_check_branch
          %497 = sbr.rel (%p495) target = $region44
        $region43: #{decoder_forward.1} parent=39 // pred_region
          %p498 = scmp.lt.s32.totalorder %s15, 1
          %s499 = scalar_select %p498, %s15, 1
          %s500 = smul.addr %s499, 8
          %s501 = scalar_lea.vmem %s2, %s500
        $region44: #{decoder_forward.1} parent=39 // pred_fallthru
          _
      $region40: #{decoder_forward.1} parent=5 // pred_fallthru
        _
    $region6: #{decoder_forward.1} parent=1 // loop_footer
      %s13 = sadd.s32 1, %s9
    $region7: #{decoder_forward.1} parent=1 // loop_footer_branch
      %8 = sbr.rel target = $region3
    $region8: #{decoder_forward.1} parent=1 // loop_exit
      _
    %502 = vsyncpa [#allocation3], 1
    %s503 = scalar_lea.sflag [#allocation3], 1
    %504 = vsyncpa %s503, 1

</llo_original>
